<compile_context>
chip_gen: v7x
topology: tpu7x:2x2x1
jax: 0.10.0
libtpu: 0.0.40
codegen_flags: <defaults>
</compile_context>

<pallas_src>
import jax
import jax.numpy as jnp
from jax.experimental import pallas as pl
from jax.experimental.pallas import tpu as pltpu


def _round_up(x, m):
    return ((x + m - 1) // m) * m


def _cdiv(a, b):
    return (a + b - 1) // b


def prenet_kernel(x_ref, w_ref, b_ref, o_ref):
    # y = x @ W^T + b ; the weight is passed pre-transposed as (d_code, N_pad).
    y = jnp.dot(x_ref[...], w_ref[...], preferred_element_type=jnp.float32)
    y = y + b_ref[...].astype(jnp.float32)          # (1, N_pad) broadcasts over rows
    # F.leaky_relu default negative_slope = 0.01, computed in f32.
    o_ref[...] = jnp.where(y > 0, y, 0.01 * y).astype(o_ref.dtype)


def prepare_prenet_params(weight, bias, *, param_dtype=None):
    """One-time (init) prep: transpose the PyTorch-layout weight (d_model, d_code)
    to (d_code, N_pad) with d_model padded up to a lane multiple (128) so every
    output store is lane-dense; bias becomes a (1, N_pad) row.  Call once and
    reuse across forward calls (this is NOT per-token work)."""
    d_model, d_code = weight.shape
    n_pad = _round_up(d_model, 128)
    w_t = weight.T
    b_row = bias.reshape(1, d_model)
    if n_pad != d_model:
        w_t = jnp.pad(w_t, ((0, 0), (0, n_pad - d_model)))
        b_row = jnp.pad(b_row, ((0, 0), (0, n_pad - d_model)))
    if param_dtype is not None:
        # Small & fully VMEM-resident -> casting the weight once is cheap.
        w_t = w_t.astype(param_dtype)
    return w_t, b_row, d_model


def prenet_forward(x, w_t, b_row, d_model, *, tm=1024, out_dtype=None):
    """x: (..., d_code); (w_t, b_row, d_model) from prepare_prenet_params."""
    d_code = x.shape[-1]
    n_pad = w_t.shape[1]
    lead_shape = x.shape[:-1]
    out_dtype = x.dtype if out_dtype is None else out_dtype

    x2d = x.reshape(-1, d_code)
    M = x2d.shape[0]

    # Sublane packing of the streamed input dtype: f32 -> 8 rows/vreg, bf16 -> 16.
    rnd = 16 if x2d.dtype.itemsize == 2 else 8

    # --- row-tile sizing -----------------------------------------------------
    # Keep the resident weight + double-buffered x and out tiles comfortably
    # under the scoped-VMEM default on all generations.
    x_bytes = x2d.dtype.itemsize
    o_bytes = jnp.dtype(out_dtype).itemsize
    w_bytes = w_t.size * w_t.dtype.itemsize + b_row.size * b_row.dtype.itemsize
    budget = 24 * 1024 * 1024
    per_row = 2 * d_code * x_bytes + 2 * n_pad * o_bytes
    rows_fit = max(((budget - w_bytes) // per_row) // rnd * rnd, rnd)
    tm_eff = min(_round_up(tm, rnd), rows_fit)
    if M <= tm_eff:
        if M > 4 * rnd:
            # Enough work to split: keep >= 2 row tiles so both v7x TensorCores
            # get a share of the "parallel" M axis.
            tm_eff = _round_up(_cdiv(M, 2), rnd)
        else:
            tm_eff = _round_up(max(M, 1), rnd)
    grid_m = _cdiv(M, tm_eff)

    out = pl.pallas_call(
        prenet_kernel,
        out_shape=jax.ShapeDtypeStruct((M, n_pad), out_dtype),
        grid_spec=pltpu.PrefetchScalarGridSpec(
            num_scalar_prefetch=0,
            grid=(grid_m,),
            in_specs=[
                # x rows stream; K is the full (unpadded) last dim of x.
                pl.BlockSpec((tm_eff, d_code), lambda i: (i, 0)),
                # Weight & bias: single block, constant index -> DMA'd once and
                # fully VMEM-resident across the whole M sweep.
                pl.BlockSpec((d_code, n_pad), lambda i: (0, 0)),
                pl.BlockSpec((1, n_pad), lambda i: (0, 0)),
            ],
            out_specs=pl.BlockSpec((tm_eff, n_pad), lambda i: (i, 0)),
        ),
        compiler_params=pltpu.CompilerParams(
            dimension_semantics=("parallel",)),
    )(x2d, w_t, b_row)

    if n_pad != d_model:          # only when d_model is not lane-aligned
        out = out[:, :d_model]
    return out.reshape(*lead_shape, d_model)


if __name__ == "__main__":
    # Small shapes consistent with PreNet: x is (batch, seq, d_code)
    batch, seq, d_code, d_model = 2, 8, 32, 64

    key = jax.random.PRNGKey(0)
    kx, kw, kb = jax.random.split(key, 3)

    x = jax.random.normal(kx, (batch, seq, d_code), dtype=jnp.float32)
    # Deterministic parameter init (nn.Linear-like scale)
    bound = 1.0 / (d_code ** 0.5)
    weight = jax.random.uniform(kw, (d_model, d_code), jnp.float32, -bound, bound)
    bias = jax.random.uniform(kb, (d_model,), jnp.float32, -bound, bound)

    def torch_ref(xx):
        r = xx @ weight.T + bias
        return jnp.where(r > 0, r, 0.01 * r)

    # One-time parameter prep (transpose + lane padding), reused across calls.
    w_t, b_row, dm = prepare_prenet_params(weight, bias)

    # f32 path
    y = jax.block_until_ready(prenet_forward(x, w_t, b_row, dm))
    ref = torch_ref(x)
    assert y.shape == (batch, seq, d_model)
    assert jnp.allclose(y, ref, atol=1e-5, rtol=1e-5)

    # Ragged row count (batch*seq = 21, not a multiple of 8): handled by the
    # cdiv grid + masked partial edge block, no wrapper-side padding of x.
    x2 = jax.random.normal(kx, (3, 7, d_code), dtype=jnp.float32)
    y2 = jax.block_until_ready(prenet_forward(x2, w_t, b_row, dm))
    assert y2.shape == (3, 7, d_model)
    assert jnp.allclose(y2, torch_ref(x2), atol=1e-5, rtol=1e-5)

    # bf16 streaming path (v6e/v7x bandwidth option): the producer hands us
    # bf16 x directly (no wrapper-side cast pass), the weight was prepared in
    # bf16 once at init, and the dominant output stream is bf16 as well.
    w_t16, b_row16, _ = prepare_prenet_params(weight, bias, param_dtype=jnp.bfloat16)
    x16 = x.astype(jnp.bfloat16)   # stands in for an upstream bf16 producer
    y3 = jax.block_until_ready(
        prenet_forward(x16, w_t16, b_row16, dm, out_dtype=jnp.bfloat16))
    assert y3.dtype == jnp.bfloat16
    assert jnp.allclose(y3.astype(jnp.float32), ref, atol=5e-2, rtol=5e-2)

    print("KERNEL_OK")
</pallas_src>

<mosaic_0001>
module attributes {stable_mosaic.version = 11 : i64} {
  func.func @prenet_kernel(%arg0: i32, %arg1: memref<16x32xf32, #tpu.memory_space<vmem>>, %arg2: memref<32x128xf32, #tpu.memory_space<vmem>>, %arg3: memref<1x128xf32, #tpu.memory_space<vmem>>, %arg4: memref<16x128xf32, #tpu.memory_space<vmem>>) attributes {dimension_semantics = [#tpu.dimension_semantics<parallel>], iteration_bounds = array<i64: 1>, scalar_prefetch = 0 : i64, scratch_operands = 0 : i64, tpu.core_type = #tpu.core_type<tc>, window_params = [{transform_indices = @transform_0, window_bounds = array<i64: 16, 32>}, {pipeline_mode = #tpu.pipeline_mode<synchronous>, transform_indices = @transform_1, window_bounds = array<i64: 32, 128>}, {pipeline_mode = #tpu.pipeline_mode<synchronous>, transform_indices = @transform_2, window_bounds = array<i64: 1, 128>}, {transform_indices = @transform_3, window_bounds = array<i64: 16, 128>}]} {
    %c0 = arith.constant 0 : index
    %c0_0 = arith.constant 0 : index
    %0 = vector.load %arg1[%c0, %c0_0] : memref<16x32xf32, #tpu.memory_space<vmem>>, vector<16x32xf32>
    %c0_1 = arith.constant 0 : index
    %c0_2 = arith.constant 0 : index
    %1 = vector.load %arg2[%c0_1, %c0_2] : memref<32x128xf32, #tpu.memory_space<vmem>>, vector<32x128xf32>
    %cst = arith.constant dense<0.000000e+00> : vector<16x128xf32>
    %2 = tpu.matmul %0, %1, %cst {dimension_numbers = #tpu.dot_dimension_numbers<[1], [0], [0], [1], [0, 0, 1, 1], [], []>} : vector<16x32xf32>, vector<32x128xf32>, vector<16x128xf32> -> vector<16x128xf32>
    %c0_3 = arith.constant 0 : index
    %c0_4 = arith.constant 0 : index
    %3 = vector.load %arg3[%c0_3, %c0_4] : memref<1x128xf32, #tpu.memory_space<vmem>>, vector<1x128xf32>
    %4 = vector.broadcast %3 : vector<1x128xf32> to vector<16x128xf32>
    %5 = arith.addf %2, %4 : vector<16x128xf32>
    %cst_5 = arith.constant 0.000000e+00 : f32
    %6 = vector.broadcast %cst_5 : f32 to vector<16x128xf32>
    %7 = arith.cmpf ogt, %5, %6 : vector<16x128xf32>
    %cst_6 = arith.constant 0.00999999977 : f32
    %8 = vector.broadcast %cst_6 : f32 to vector<16x128xf32>
    %9 = arith.mulf %8, %5 : vector<16x128xf32>
    %10 = arith.select %7, %5, %9 : vector<16x128xi1>, vector<16x128xf32>
    %c0_7 = arith.constant 0 : index
    %c0_8 = arith.constant 0 : index
    %11 = vector.load %arg4[%c0_7, %c0_8] : memref<16x128xf32, #tpu.memory_space<vmem>>, vector<16x128xf32>
    tpu.vector_store %arg4[%c0_7, %c0_8], %10 {strides = array<i32>} : memref<16x128xf32, #tpu.memory_space<vmem>>, vector<16x128xf32>,
    return
  }
  func.func @transform_0(%arg0: i32) -> (i32, i32) {
    %c0_i32 = arith.constant 0 : i32
    %c0_i32_0 = arith.constant 0 : i32
    return %arg0, %c0_i32 : i32, i32
  }
  func.func @transform_1(%arg0: i32) -> (i32, i32) {
    %c0_i32 = arith.constant 0 : i32
    %c0_i32_0 = arith.constant 0 : i32
    %c0_i32_1 = arith.constant 0 : i32
    return %c0_i32, %c0_i32_0 : i32, i32
  }
  func.func @transform_2(%arg0: i32) -> (i32, i32) {
    %c0_i32 = arith.constant 0 : i32
    %c0_i32_0 = arith.constant 0 : i32
    %c0_i32_1 = arith.constant 0 : i32
    return %c0_i32, %c0_i32_0 : i32, i32
  }
  func.func @transform_3(%arg0: i32) -> (i32, i32) {
    %c0_i32 = arith.constant 0 : i32
    %c0_i32_0 = arith.constant 0 : i32
    return %arg0, %c0_i32 : i32, i32
  }
}

</mosaic_0001>

<llo_original>
// kernel: tpu_custom_call.1
$region0: #{tpu_custom_call.1}
  #allocation0 [shape = 'u32[]', space=smem, size = 0x4, offset = 0x4, fixed_abs, tag = 'smem constant byte address 0x4 - core index']
  #allocation1 [shape = 'u32[144,128]{1,0:T(1,128)}', space=vmem, size = 0x12000, scoped, tag = 'internal scratch']
  %s0 = inlined_call_operand.hbm [shape: f32[16,32], index: 0, kind: input, shape index: {}]
  %s1 = inlined_call_operand.hbm [shape: f32[32,128], index: 1, kind: input, shape index: {}]
  %s2 = inlined_call_operand.vmem [shape: f32[1,128], index: 2, kind: input, shape index: {}]
  %s3 = inlined_call_operand.hbm [shape: f32[16,128], index: 3, kind: output, shape index: {}]
  %s4 = sld [smem:[#allocation0]]
  $region30: #{tpu_custom_call.1} parent=0
    _
  %s6 = ssub.s32 1, %s4
  %s7 = scalar_select 0, %s6, %s4
  $region1: #{tpu_custom_call.1} parent=0
    #allocation2 [shape = 'u8[8192]{0}', space=vmem, size = 0x2000, scoped, tag = 'input window, operand 0, single buffered']
    #allocation3 [shape = 's32[1]{0}', space=sflag, size = 0x4, scoped, tag = 'scoped memory for tpu_custom_call.1']
    #allocation4 [shape = 's32[1]{0}', space=sflag, size = 0x4, scoped, tag = 'scoped memory for tpu_custom_call.1']
    #allocation5 [shape = 'u8[16384]{0}', space=vmem, size = 0x4000, scoped, tag = 'input window, operand 1, single buffered']
    #allocation6 [shape = 's32[1]{0}', space=sflag, size = 0x4, scoped, tag = 'scoped memory for tpu_custom_call.1']
    #allocation7 [shape = 'u8[8192]{0}', space=vmem, size = 0x2000, scoped, tag = 'output window, operand 0, single buffered']
    %8 = vsyncpa [#allocation3], 0
    %9 = vsyncpa [#allocation6], 0
    %10 = vsyncpa [#allocation4], 0
    // Predicated region
    $region2: #{tpu_custom_call.1} parent=1 // pred_check
      _
    $region3: #{tpu_custom_call.1} parent=1 // pred_check_branch
      %12 = sbr.rel (0) target = $region5
    $region4: #{tpu_custom_call.1} parent=1 // pred_region
      %s14 = ssub.s32 256, 256
      %15 = vsyncadd [#allocation3], %s14
      %s16 = sshll.u32 [#allocation2], 4
      %s17 = int_to_ptr.vmem [resolvable:$true] %s16
      %22 = dma.hbm_to_vmem [thread:$0]  %s0, 256, %s17, [#allocation3], 128, 128, 8
    $region5: #{tpu_custom_call.1} parent=1 // pred_fallthru
      _
    // Predicated region
    $region6: #{tpu_custom_call.1} parent=1 // pred_check
      _
    $region7: #{tpu_custom_call.1} parent=1 // pred_check_branch
      %24 = sbr.rel (0) target = $region9
    $region8: #{tpu_custom_call.1} parent=1 // pred_region
      %s26 = ssub.s32 512, 512
      %27 = vsyncadd [#allocation6], %s26
      %s28 = sshll.u32 [#allocation5], 4
      %s29 = int_to_ptr.vmem [resolvable:$true] %s28
      %34 = dma.hbm_to_vmem [thread:$0]  %s1, 512, %s29, [#allocation6], 128, 128, 8
    $region9: #{tpu_custom_call.1} parent=1 // pred_fallthru
      _
    // Predicated region
    $region10: #{tpu_custom_call.1} parent=1 // pred_check
      _
    $region11: #{tpu_custom_call.1} parent=1 // pred_check_branch
      %36 = sbr.rel (0) target = $region13
    $region12: #{tpu_custom_call.1} parent=1 // pred_region
      _
    $region13: #{tpu_custom_call.1} parent=1 // pred_fallthru
      _
    // Predicated region
    $region14: #{tpu_custom_call.1} parent=1 // pred_check
      _
    $region15: #{tpu_custom_call.1} parent=1 // pred_check_branch
      %38 = sbr.rel (0) target = $region17
    $region16: #{tpu_custom_call.1} parent=1 // pred_region
      %39 = dma.done [#allocation3], 256
    $region17: #{tpu_custom_call.1} parent=1 // pred_fallthru
      _
    // Predicated region
    $region18: #{tpu_custom_call.1} parent=1 // pred_check
      _
    $region19: #{tpu_custom_call.1} parent=1 // pred_check_branch
      %41 = sbr.rel (0) target = $region21
    $region20: #{tpu_custom_call.1} parent=1 // pred_region
      %42 = dma.done [#allocation6], 512
    $region21: #{tpu_custom_call.1} parent=1 // pred_fallthru
      _
    %v43 = vld [vmem:[#allocation2] sm:$0xff]
    %v44 = vld [vmem:[#allocation2 + $0x8] sm:$0xff]
    %v45 = vld [vmem:[#allocation5] sm:$0xff]
    %v46 = vld [vmem:[#allocation5 + $0x8] sm:$0xff]
    %v47 = vld [vmem:[#allocation5 + $0x10] sm:$0xff]
    %v48 = vld [vmem:[#allocation5 + $0x18] sm:$0xff]
    %v49 = vld [vmem:[%s2] sm:$0x1]
    %v51 = vlaneseq
    %v52 = vshrl.u32 %v51, 7
    %v53 = vsub.s32 0, %v52
    %v54 = vrot.slane %v49, %v53
    %vm56 = vcmask 261120
    %v58 = vsel %vm56, %v43, 0
    %v61 = vsel %vm56, %v44, 0
    %63 = vmatprep.subr.mxu0 0.0
    %64 = vmatpush1.msra.mxu0 %v45
    %65 = vmatprep.subr.mxu0 0.0
    %66 = vmatpush1.msra.mxu0 %v46
    %67 = vmatprep.subr.mxu0 0.0
    %68 = vmatpush1.msra.mxu0 %v47
    %69 = vmatprep.subr.mxu0 0.0
    %70 = vmatpush1.msra.mxu0 %v48
    %71 = vmatprep.subr.mxu0 0.0
    %72 = vmatpush1.msra.mxu0 0.0
    %73 = vmatprep.subr.mxu0 0.0
    %74 = vmatpush1.msra.mxu0 0.0
    %75 = vmatprep.subr.mxu0 0.0
    %76 = vmatpush1.msra.mxu0 0.0
    %77 = vmatprep.subr.mxu0 0.0
    %78 = vmatpush1.msra.mxu0 0.0
    %79 = vmatprep.subr.mxu0 0.0
    %80 = vmatpush1.msra.mxu0 0.0
    %81 = vmatprep.subr.mxu0 0.0
    %82 = vmatpush1.msra.mxu0 0.0
    %83 = vmatprep.subr.mxu0 0.0
    %84 = vmatpush1.msra.mxu0 0.0
    %85 = vmatprep.subr.mxu0 0.0
    %86 = vmatpush1.msra.mxu0 0.0
    %87 = vmatprep.subr.mxu0 0.0
    %88 = vmatpush1.msra.mxu0 0.0
    %89 = vmatprep.subr.mxu0 0.0
    %90 = vmatpush1.msra.mxu0 0.0
    %91 = vmatprep.subr.mxu0 0.0
    %92 = vmatpush1.msra.mxu0 0.0
    %93 = vmatprep.subr.mxu0 0.0
    %94 = vmatpush1.msra.mxu0 0.0
    %95 = vmatprep.subr.mxu0 0.0
    %96 = vmatpush1.msra.mxu0 0.0
    %97 = vmatprep.subr.mxu0 0.0
    %98 = vmatpush1.msra.mxu0 0.0
    %99 = vmatprep.subr.mxu0 0.0
    %100 = vmatpush1.msra.mxu0 0.0
    %101 = vmatprep.subr.mxu0 0.0
    %102 = vmatpush1.msra.mxu0 0.0
    %103 = vmatprep.subr.mxu0 0.0
    %104 = vmatpush1.msra.mxu0 0.0
    %105 = vmatprep.subr.mxu0 0.0
    %106 = vmatpush1.msra.mxu0 0.0
    %107 = vmatprep.subr.mxu0 0.0
    %108 = vmatpush1.msra.mxu0 0.0
    %109 = vmatprep.subr.mxu0 0.0
    %110 = vmatpush1.msra.mxu0 0.0
    %111 = vmatprep.subr.mxu0 0.0
    %112 = vmatpush1.msra.mxu0 0.0
    %113 = vmatprep.subr.mxu0 0.0
    %114 = vmatpush1.msra.mxu0 0.0
    %115 = vmatprep.subr.mxu0 0.0
    %116 = vmatpush1.msra.mxu0 0.0
    %117 = vmatprep.subr.mxu0 0.0
    %118 = vmatpush1.msra.mxu0 0.0
    %119 = vmatprep.subr.mxu0 0.0
    %120 = vmatpush1.msra.mxu0 0.0
    %121 = vmatprep.subr.mxu0 0.0
    %122 = vmatpush1.msra.mxu0 0.0
    %123 = vmatprep.subr.mxu0 0.0
    %124 = vmatpush1.msra.mxu0 0.0
    %125 = vmatprep.subr.mxu0 0.0
    %126 = vmatpush1.msra.mxu0 0.0
    %127 = vmatprep.mubr.f32.mxu0 0.0
    %128 = vmatmul.mubr.f32.gmra.mrb[0].mxu0 %v58
    %v129 = vpop.f32.mrb[0].mxu0
    %v130 = vadd.f32 %v54, %v129
    %v131 = vpop.f32.mrb[0].mxu0
    %132 = vmatprep.mubr.f32.mxu0 0.0
    %133 = vmatmul.mubr.f32.gmra.mrb[0].mxu0 %v61
    %v134 = vpop.f32.mrb[0].mxu0
    %v135 = vadd.f32 %v54, %v134
    %v136 = vpop.f32.mrb[0].mxu0
    %137 = vdwg.mxu0
    %vm138 = vcmp.gt.f32.partialorder %v130, 0.0
    %vm139 = vcmp.gt.f32.partialorder %v135, 0.0
    %v140 = vmul.f32 %v130, 0.01
    %v141 = vmul.f32 %v135, 0.01
    %v142 = vsel %vm138, %v130, %v140
    %v143 = vsel %vm139, %v135, %v141
    %144 = vst [vmem:[#allocation7] sm:$0xff] %v142
    %145 = vst [vmem:[#allocation7 + $0x8] sm:$0xff] %v143
    // Predicated region
    $region22: #{tpu_custom_call.1} parent=1 // pred_check
      _
    $region23: #{tpu_custom_call.1} parent=1 // pred_check_branch
      %147 = sbr.rel (0) target = $region25
    $region24: #{tpu_custom_call.1} parent=1 // pred_region
      %s149 = ssub.s32 256, 256
      %150 = vsyncadd [#allocation4], %s149
      %s151 = sshll.u32 [#allocation7], 4
      %s152 = int_to_ptr.vmem [resolvable:$true] %s151
      %157 = dma.vmem_to_hbm [thread:$0]  %s152, 256, %s3, [#allocation4], 128, 128, 8
    $region25: #{tpu_custom_call.1} parent=1 // pred_fallthru
      _
    // Predicated region
    $region26: #{tpu_custom_call.1} parent=1 // pred_check
      _
    $region27: #{tpu_custom_call.1} parent=1 // pred_check_branch
      %159 = sbr.rel (0) target = $region29
    $region28: #{tpu_custom_call.1} parent=1 // pred_region
      %160 = dma.done [#allocation4], 256
    $region29: #{tpu_custom_call.1} parent=1 // pred_fallthru
      _
    %161 = vsyncpa [#allocation3], 1
    %162 = vsyncpa [#allocation6], 1
    %163 = vsyncpa [#allocation4], 1

</llo_original>
